<compile_context>
chip_gen: v7x
topology: tpu7x:2x2x1
jax: 0.10.0
libtpu: 0.0.40
codegen_flags: <defaults>
</compile_context>

<pallas_src>
import functools

import jax
import jax.numpy as jnp
from jax.experimental import pallas as pl
from jax.experimental.pallas import tpu as pltpu


# ----------------------------------------------------------------------------
# Fused kernel:
#   h      = tanh(h0 @ W1 + b1)                     (B, D)   bf16 in, f32 acc
#   scores = (h @ wlm_sub) * scale                  (B, Lp)  padded cols -> -inf
#   loss   = mean CE over rows with label != -100
#   right  = #rows where argmax(scores) == label (valid rows only)
#   out    = (1, 128) f32 slab: lane0=loss, lane1=right, lane2=n_valid
# ----------------------------------------------------------------------------
def _fused_head_ce_acc_kernel(h0_ref, w1_ref, b1_ref, wlm_ref, labels_ref,
                              out_ref, *, scale, n_labels):
    # --- synthetic decoder head ---------------------------------------------
    h = jnp.tanh(
        jnp.dot(h0_ref[...], w1_ref[...], preferred_element_type=jnp.float32)
        + b1_ref[...]
    )                                                            # (B, D) f32

    # --- project straight onto the (padded) label columns, apply T5 scale ---
    scores = (
        jnp.dot(h.astype(wlm_ref.dtype), wlm_ref[...],
                preferred_element_type=jnp.float32) * scale
    )                                                            # (B, Lp) f32

    b, lp = scores.shape
    col = jax.lax.broadcasted_iota(jnp.int32, (b, lp), 1)
    row_col = jax.lax.broadcasted_iota(jnp.int32, (b, 1), 0)

    # Labels come in over the scalar path (SMEM); splat into a (B, 1) column
    # with B static scalar selects (B is tiny and static).
    lbl_col = jnp.full((b, 1), -100, dtype=jnp.int32)
    for i in range(b):
        lbl_col = jnp.where(row_col == i, labels_ref[i], lbl_col)

    valid = (lbl_col != -100).astype(jnp.float32)                # (B, 1)

    # Mask padded label columns out of the softmax / argmax.
    scores = jnp.where(col < n_labels, scores, jnp.float32(-1e30))

    # --- stable log-softmax cross entropy (ignore_index=-100, mean) ---------
    m = jnp.max(scores, axis=-1, keepdims=True)                  # (B, 1)
    lse = jnp.log(jnp.sum(jnp.exp(scores - m), axis=-1, keepdims=True)) + m
    onehot = (col == lbl_col).astype(jnp.float32)                # -100 -> all 0
    tgt = jnp.sum(scores * onehot, axis=-1, keepdims=True)       # (B, 1)
    per_row = (lse - tgt) * valid                                # (B, 1)

    n_valid = jnp.sum(valid, keepdims=True)                      # (1, 1)
    loss = jnp.sum(per_row, keepdims=True) / jnp.maximum(n_valid, 1.0)

    # --- softmax accuracy: first argmax index per row == label --------------
    is_max = scores == m
    pred = jnp.min(jnp.where(is_max, col, lp), axis=-1, keepdims=True)  # (B,1)
    right = jnp.sum(((pred == lbl_col) & (lbl_col != -100)).astype(jnp.float32),
                    keepdims=True)                               # (1, 1)

    # --- pack [loss, right, n_valid] into one lane-dense (1, 128) slab ------
    lane = jax.lax.broadcasted_iota(jnp.int32, (1, 128), 1)
    packed = jnp.where(lane == 0, loss,
             jnp.where(lane == 1, right,
             jnp.where(lane == 2, n_valid, 0.0)))
    out_ref[...] = packed


def fused_head_ce_acc(h0, w1, b1, wlm_sub, labels, scale, n_labels):
    kernel = functools.partial(_fused_head_ce_acc_kernel,
                               scale=float(scale), n_labels=int(n_labels))
    vmem = pl.BlockSpec(memory_space=pltpu.MemorySpace.VMEM)
    return pl.pallas_call(
        kernel,
        out_shape=jax.ShapeDtypeStruct((1, 128), jnp.float32),
        in_specs=[vmem, vmem, vmem, vmem,
                  pl.BlockSpec(memory_space=pltpu.MemorySpace.SMEM)],  # labels
        out_specs=vmem,
    )(h0, w1, b1, wlm_sub, labels)


def _round_up(x, m):
    return ((x + m - 1) // m) * m


# ----------------------------------------------------------------------------
# TextClassifier forward (glue in plain JAX, hot path in one Pallas kernel).
# ----------------------------------------------------------------------------
def text_classifier_forward(data, params, labelids, dim_model, vocab, sentinel_id):
    batch = data["input_ids"].shape[0]
    d = params["w1"].shape[0]
    n_labels = int(labelids.shape[0])

    # decoder_input_ids = zeros(batch, 2); decoder_input_ids[:, 1] = 32099
    # (sentinel_id stands in for 32099 in the synthetic small vocab).
    dec_ids = jnp.zeros((batch, 2), dtype=jnp.int32).at[:, 1].set(sentinel_id)
    _decoder_length = jnp.ones((batch,), dtype=jnp.int32) + 1  # kept for fidelity

    # Only position-1 logits feed the classifier -> only sentinel rows.
    h0 = params["embed"][dec_ids[:, 1]].astype(jnp.bfloat16)     # (B, D)
    w1 = params["w1"].astype(jnp.bfloat16)                        # (D, D)
    # Gather the label columns of the LM head ONCE (D, L) instead of a
    # vocab-wide projection followed by an XLA gather.
    wlm_sub = params["wlm"][:, labelids].astype(jnp.bfloat16)     # (D, L)
    labels = data["labels"].astype(jnp.int32)

    # Pad to (8, 128)-aligned tiles so every kernel op is full-vreg/unmasked.
    b_pad = _round_up(batch, 8)
    l_pad = _round_up(n_labels, 128)
    if b_pad != batch:
        h0 = jnp.pad(h0, ((0, b_pad - batch), (0, 0)))
        labels = jnp.pad(labels, (0, b_pad - batch), constant_values=-100)
    if l_pad != n_labels:
        wlm_sub = jnp.pad(wlm_sub, ((0, 0), (0, l_pad - n_labels)))

    scale = 100.0 * (float(dim_model) ** -0.5)

    out = fused_head_ce_acc(h0, w1, params["b1"], wlm_sub, labels,
                            scale, n_labels)
    return {"loss": out[0, 0],
            "acc_result": {"right": out[0, 1], "total": out[0, 2]}}


# ----------------------------------------------------------------------------
# Pure-JAX reference (same bf16 weight quantization, f32 accumulation).
# ----------------------------------------------------------------------------
def reference_forward(data, params, labelids, dim_model, vocab, sentinel_id):
    batch = data["input_ids"].shape[0]
    dec = jnp.full((batch,), sentinel_id, dtype=jnp.int32)
    h0 = params["embed"][dec].astype(jnp.bfloat16)
    w1 = params["w1"].astype(jnp.bfloat16)
    wlm_sub = params["wlm"][:, labelids].astype(jnp.bfloat16)
    h = jnp.tanh(jnp.dot(h0, w1, preferred_element_type=jnp.float32)
                 + params["b1"])
    scores = jnp.dot(h.astype(jnp.bfloat16), wlm_sub,
                     preferred_element_type=jnp.float32)
    scores = scores * (100.0 * float(dim_model) ** -0.5)
    labels = data["labels"]
    valid = labels != -100
    safe = jnp.where(valid, labels, 0)
    logp = jax.nn.log_softmax(scores, axis=-1)
    nll = -jnp.take_along_axis(logp, safe[:, None], axis=-1)[:, 0]
    loss = jnp.sum(nll * valid) / jnp.maximum(jnp.sum(valid), 1)
    pred = jnp.argmax(scores, axis=-1)
    right = jnp.sum((pred == safe) & valid)
    return loss, right.astype(jnp.float32), jnp.sum(valid).astype(jnp.float32)


if __name__ == "__main__":
    # small synthetic config
    B, SEQ, D, V = 4, 16, 128, 512
    LABELIDS = jnp.array([3, 17, 42, 99, 150, 260, 301, 450], dtype=jnp.int32)
    SENTINEL = V - 1  # proxy for token id 32099 in the small vocab

    key = jax.random.PRNGKey(0)
    k_e, k_w1, k_b1, k_lm, k_in, k_lb = jax.random.split(key, 6)
    params = {
        "embed": jax.random.normal(k_e, (V, D), jnp.float32) * 0.02,
        "w1": jax.random.normal(k_w1, (D, D), jnp.float32) * (D ** -0.5),
        "b1": (jax.random.normal(k_b1, (1, D), jnp.float32) * 0.01),
        "wlm": jax.random.normal(k_lm, (D, V), jnp.float32) * (D ** -0.5),
    }

    labels = jax.random.randint(k_lb, (B,), 0, LABELIDS.shape[0], dtype=jnp.int32)
    labels = labels.at[0].set(-100)  # exercise ignore_index
    data = {
        "input_ids": jax.random.randint(k_in, (B, SEQ), 0, V, dtype=jnp.int32),
        "labels": labels,
    }

    out = text_classifier_forward(data, params, LABELIDS, D, V, SENTINEL)
    out = jax.block_until_ready(out)

    ref_loss, ref_right, ref_total = reference_forward(
        data, params, LABELIDS, D, V, SENTINEL
    )
    assert jnp.allclose(out["loss"], ref_loss, rtol=1e-3, atol=1e-3)
    assert jnp.allclose(out["acc_result"]["right"], ref_right)
    assert jnp.allclose(out["acc_result"]["total"], ref_total)
    assert bool(jnp.isfinite(out["loss"]))

    print("KERNEL_OK")
</pallas_src>

<mosaic_0001>
module attributes {stable_mosaic.version = 11 : i64} {
  func.func @_fused_head_ce_acc_kernel(%arg0: memref<8x128xbf16, #tpu.memory_space<vmem>>, %arg1: memref<128x128xbf16, #tpu.memory_space<vmem>>, %arg2: memref<1x128xf32, #tpu.memory_space<vmem>>, %arg3: memref<128x128xbf16, #tpu.memory_space<vmem>>, %arg4: memref<8xi32, #tpu.memory_space<smem>>, %arg5: memref<1x128xf32, #tpu.memory_space<vmem>>) attributes {dimension_semantics = [], scalar_prefetch = 0 : i64, scratch_operands = 0 : i64, tpu.core_type = #tpu.core_type<tc>} {
    %c0 = arith.constant 0 : index
    %c0_0 = arith.constant 0 : index
    %0 = vector.load %arg0[%c0, %c0_0] : memref<8x128xbf16, #tpu.memory_space<vmem>>, vector<8x128xbf16>
    %c0_1 = arith.constant 0 : index
    %c0_2 = arith.constant 0 : index
    %1 = vector.load %arg1[%c0_1, %c0_2] : memref<128x128xbf16, #tpu.memory_space<vmem>>, vector<128x128xbf16>
    %cst = arith.constant dense<0.000000e+00> : vector<8x128xf32>
    %2 = tpu.matmul %0, %1, %cst {dimension_numbers = #tpu.dot_dimension_numbers<[1], [0], [0], [1], [0, 0, 1, 1], [], []>} : vector<8x128xbf16>, vector<128x128xbf16>, vector<8x128xf32> -> vector<8x128xf32>
    %c0_3 = arith.constant 0 : index
    %c0_4 = arith.constant 0 : index
    %3 = vector.load %arg2[%c0_3, %c0_4] : memref<1x128xf32, #tpu.memory_space<vmem>>, vector<1x128xf32>
    %4 = vector.broadcast %3 : vector<1x128xf32> to vector<8x128xf32>
    %5 = arith.addf %2, %4 : vector<8x128xf32>
    %6 = math.tanh %5 : vector<8x128xf32>
    %7 = arith.truncf %6 : vector<8x128xf32> to vector<8x128xbf16>
    %c0_5 = arith.constant 0 : index
    %c0_6 = arith.constant 0 : index
    %8 = vector.load %arg3[%c0_5, %c0_6] : memref<128x128xbf16, #tpu.memory_space<vmem>>, vector<128x128xbf16>
    %cst_7 = arith.constant dense<0.000000e+00> : vector<8x128xf32>
    %9 = tpu.matmul %7, %8, %cst_7 {dimension_numbers = #tpu.dot_dimension_numbers<[1], [0], [0], [1], [0, 0, 1, 1], [], []>} : vector<8x128xbf16>, vector<128x128xbf16>, vector<8x128xf32> -> vector<8x128xf32>
    %cst_8 = arith.constant 8.83883476 : f32
    %10 = vector.broadcast %cst_8 : f32 to vector<8x128xf32>
    %11 = arith.mulf %9, %10 : vector<8x128xf32>
    %12 = tpu.iota {dimensions = array<i32: 1>} : vector<8x128xi32>
    %13 = tpu.iota {dimensions = array<i32: 0>} : vector<8x1xi32>
    %c-100_i32 = arith.constant -100 : i32
    %14 = vector.broadcast %c-100_i32 : i32 to vector<8x1xi32>
    %c0_i32 = arith.constant 0 : i32
    %15 = vector.broadcast %c0_i32 : i32 to vector<8x1xi32>
    %16 = arith.cmpi eq, %13, %15 : vector<8x1xi32>
    %c0_9 = arith.constant 0 : index
    %17 = memref.load %arg4[%c0_9] : memref<8xi32, #tpu.memory_space<smem>>
    %18 = vector.broadcast %17 : i32 to vector<8x1xi32>
    %19 = arith.select %16, %18, %14 : vector<8x1xi1>, vector<8x1xi32>
    %c1_i32 = arith.constant 1 : i32
    %20 = vector.broadcast %c1_i32 : i32 to vector<8x1xi32>
    %21 = arith.cmpi eq, %13, %20 : vector<8x1xi32>
    %c1 = arith.constant 1 : index
    %22 = memref.load %arg4[%c1] : memref<8xi32, #tpu.memory_space<smem>>
    %23 = vector.broadcast %22 : i32 to vector<8x1xi32>
    %24 = arith.select %21, %23, %19 : vector<8x1xi1>, vector<8x1xi32>
    %c2_i32 = arith.constant 2 : i32
    %25 = vector.broadcast %c2_i32 : i32 to vector<8x1xi32>
    %26 = arith.cmpi eq, %13, %25 : vector<8x1xi32>
    %c2 = arith.constant 2 : index
    %27 = memref.load %arg4[%c2] : memref<8xi32, #tpu.memory_space<smem>>
    %28 = vector.broadcast %27 : i32 to vector<8x1xi32>
    %29 = arith.select %26, %28, %24 : vector<8x1xi1>, vector<8x1xi32>
    %c3_i32 = arith.constant 3 : i32
    %30 = vector.broadcast %c3_i32 : i32 to vector<8x1xi32>
    %31 = arith.cmpi eq, %13, %30 : vector<8x1xi32>
    %c3 = arith.constant 3 : index
    %32 = memref.load %arg4[%c3] : memref<8xi32, #tpu.memory_space<smem>>
    %33 = vector.broadcast %32 : i32 to vector<8x1xi32>
    %34 = arith.select %31, %33, %29 : vector<8x1xi1>, vector<8x1xi32>
    %c4_i32 = arith.constant 4 : i32
    %35 = vector.broadcast %c4_i32 : i32 to vector<8x1xi32>
    %36 = arith.cmpi eq, %13, %35 : vector<8x1xi32>
    %c4 = arith.constant 4 : index
    %37 = memref.load %arg4[%c4] : memref<8xi32, #tpu.memory_space<smem>>
    %38 = vector.broadcast %37 : i32 to vector<8x1xi32>
    %39 = arith.select %36, %38, %34 : vector<8x1xi1>, vector<8x1xi32>
    %c5_i32 = arith.constant 5 : i32
    %40 = vector.broadcast %c5_i32 : i32 to vector<8x1xi32>
    %41 = arith.cmpi eq, %13, %40 : vector<8x1xi32>
    %c5 = arith.constant 5 : index
    %42 = memref.load %arg4[%c5] : memref<8xi32, #tpu.memory_space<smem>>
    %43 = vector.broadcast %42 : i32 to vector<8x1xi32>
    %44 = arith.select %41, %43, %39 : vector<8x1xi1>, vector<8x1xi32>
    %c6_i32 = arith.constant 6 : i32
    %45 = vector.broadcast %c6_i32 : i32 to vector<8x1xi32>
    %46 = arith.cmpi eq, %13, %45 : vector<8x1xi32>
    %c6 = arith.constant 6 : index
    %47 = memref.load %arg4[%c6] : memref<8xi32, #tpu.memory_space<smem>>
    %48 = vector.broadcast %47 : i32 to vector<8x1xi32>
    %49 = arith.select %46, %48, %44 : vector<8x1xi1>, vector<8x1xi32>
    %c7_i32 = arith.constant 7 : i32
    %50 = vector.broadcast %c7_i32 : i32 to vector<8x1xi32>
    %51 = arith.cmpi eq, %13, %50 : vector<8x1xi32>
    %c7 = arith.constant 7 : index
    %52 = memref.load %arg4[%c7] : memref<8xi32, #tpu.memory_space<smem>>
    %53 = vector.broadcast %52 : i32 to vector<8x1xi32>
    %54 = arith.select %51, %53, %49 : vector<8x1xi1>, vector<8x1xi32>
    %c-100_i32_10 = arith.constant -100 : i32
    %55 = vector.broadcast %c-100_i32_10 : i32 to vector<8x1xi32>
    %56 = arith.cmpi ne, %54, %55 : vector<8x1xi32>
    %57 = arith.extui %56 : vector<8x1xi1> to vector<8x1xi32>
    %58 = arith.sitofp %57 : vector<8x1xi32> to vector<8x1xf32>
    %c8_i32 = arith.constant 8 : i32
    %59 = vector.broadcast %c8_i32 : i32 to vector<8x128xi32>
    %60 = arith.cmpi slt, %12, %59 : vector<8x128xi32>
    %cst_11 = arith.constant -1.000000e+30 : f32
    %61 = vector.broadcast %cst_11 : f32 to vector<8x128xf32>
    %62 = arith.select %60, %11, %61 : vector<8x128xi1>, vector<8x128xf32>
    %cst_12 = arith.constant dense<0xFF800000> : vector<8xf32>
    %63 = vector.multi_reduction <maximumf>, %62, %cst_12 [1] : vector<8x128xf32> to vector<8xf32>
    %64 = vector.shape_cast %63 : vector<8xf32> to vector<8x1xf32>
    %65 = vector.broadcast %64 : vector<8x1xf32> to vector<8x128xf32>
    %66 = arith.subf %62, %65 : vector<8x128xf32>
    %67 = math.exp %66 : vector<8x128xf32>
    %cst_13 = arith.constant dense<0.000000e+00> : vector<8xf32>
    %68 = vector.multi_reduction <add>, %67, %cst_13 [1] : vector<8x128xf32> to vector<8xf32>
    %69 = vector.shape_cast %68 : vector<8xf32> to vector<8x1xf32>
    %70 = math.log %69 : vector<8x1xf32>
    %71 = arith.addf %70, %64 : vector<8x1xf32>
    %72 = vector.broadcast %54 : vector<8x1xi32> to vector<8x128xi32>
    %73 = arith.cmpi eq, %12, %72 : vector<8x128xi32>
    %74 = arith.extui %73 : vector<8x128xi1> to vector<8x128xi32>
    %75 = arith.sitofp %74 : vector<8x128xi32> to vector<8x128xf32>
    %76 = arith.mulf %62, %75 : vector<8x128xf32>
    %cst_14 = arith.constant dense<0.000000e+00> : vector<8xf32>
    %77 = vector.multi_reduction <add>, %76, %cst_14 [1] : vector<8x128xf32> to vector<8xf32>
    %78 = vector.shape_cast %77 : vector<8xf32> to vector<8x1xf32>
    %79 = arith.subf %71, %78 : vector<8x1xf32>
    %80 = arith.mulf %79, %58 : vector<8x1xf32>
    %81 = vector.shape_cast %58 : vector<8x1xf32> to vector<1x8x1xf32>
    %cst_15 = arith.constant dense<0.000000e+00> : vector<1xf32>
    %82 = vector.multi_reduction <add>, %81, %cst_15 [1, 2] : vector<1x8x1xf32> to vector<1xf32>
    %83 = vector.shape_cast %82 : vector<1xf32> to vector<1x1x1xf32>
    %84 = vector.extract %83[0, 0, 0] : f32 from vector<1x1x1xf32>
    %85 = vector.broadcast %84 : f32 to vector<1x1xf32>
    %86 = vector.shape_cast %80 : vector<8x1xf32> to vector<1x8x1xf32>
    %cst_16 = arith.constant dense<0.000000e+00> : vector<1xf32>
    %87 = vector.multi_reduction <add>, %86, %cst_16 [1, 2] : vector<1x8x1xf32> to vector<1xf32>
    %88 = vector.shape_cast %87 : vector<1xf32> to vector<1x1x1xf32>
    %89 = vector.extract %88[0, 0, 0] : f32 from vector<1x1x1xf32>
    %90 = vector.broadcast %89 : f32 to vector<1x1xf32>
    %cst_17 = arith.constant 1.000000e+00 : f32
    %91 = vector.broadcast %cst_17 : f32 to vector<1x1xf32>
    %92 = arith.maximumf %85, %91 : vector<1x1xf32>
    %93 = arith.divf %90, %92 : vector<1x1xf32>
    %94 = vector.broadcast %64 : vector<8x1xf32> to vector<8x128xf32>
    %95 = arith.cmpf oeq, %62, %94 : vector<8x128xf32>
    %c128_i32 = arith.constant 128 : i32
    %96 = vector.broadcast %c128_i32 : i32 to vector<8x128xi32>
    %97 = arith.select %95, %12, %96 : vector<8x128xi1>, vector<8x128xi32>
    %cst_18 = arith.constant dense<2147483647> : vector<8xi32>
    %98 = vector.multi_reduction <minsi>, %97, %cst_18 [1] : vector<8x128xi32> to vector<8xi32>
    %99 = vector.shape_cast %98 : vector<8xi32> to vector<8x1xi32>
    %100 = arith.cmpi eq, %99, %54 : vector<8x1xi32>
    %c-100_i32_19 = arith.constant -100 : i32
    %101 = vector.broadcast %c-100_i32_19 : i32 to vector<8x1xi32>
    %102 = arith.cmpi ne, %54, %101 : vector<8x1xi32>
    %103 = arith.andi %100, %102 : vector<8x1xi1>
    %104 = arith.extui %103 : vector<8x1xi1> to vector<8x1xi32>
    %105 = arith.sitofp %104 : vector<8x1xi32> to vector<8x1xf32>
    %106 = vector.shape_cast %105 : vector<8x1xf32> to vector<1x8x1xf32>
    %cst_20 = arith.constant dense<0.000000e+00> : vector<1xf32>
    %107 = vector.multi_reduction <add>, %106, %cst_20 [1, 2] : vector<1x8x1xf32> to vector<1xf32>
    %108 = vector.shape_cast %107 : vector<1xf32> to vector<1x1x1xf32>
    %109 = vector.extract %108[0, 0, 0] : f32 from vector<1x1x1xf32>
    %110 = vector.broadcast %109 : f32 to vector<1x1xf32>
    %111 = tpu.iota {dimensions = array<i32: 1>} : vector<1x128xi32>
    %c0_i32_21 = arith.constant 0 : i32
    %112 = vector.broadcast %c0_i32_21 : i32 to vector<1x128xi32>
    %113 = arith.cmpi eq, %111, %112 : vector<1x128xi32>
    %c1_i32_22 = arith.constant 1 : i32
    %114 = vector.broadcast %c1_i32_22 : i32 to vector<1x128xi32>
    %115 = arith.cmpi eq, %111, %114 : vector<1x128xi32>
    %c2_i32_23 = arith.constant 2 : i32
    %116 = vector.broadcast %c2_i32_23 : i32 to vector<1x128xi32>
    %117 = arith.cmpi eq, %111, %116 : vector<1x128xi32>
    %cst_24 = arith.constant 0.000000e+00 : f32
    %118 = vector.shape_cast %85 : vector<1x1xf32> to vector<1x1xf32>
    %119 = vector.broadcast %118 : vector<1x1xf32> to vector<1x128xf32>
    %120 = vector.broadcast %cst_24 : f32 to vector<1x128xf32>
    %121 = arith.select %117, %119, %120 : vector<1x128xi1>, vector<1x128xf32>
    %122 = vector.shape_cast %110 : vector<1x1xf32> to vector<1x1xf32>
    %123 = vector.broadcast %122 : vector<1x1xf32> to vector<1x128xf32>
    %124 = arith.select %115, %123, %121 : vector<1x128xi1>, vector<1x128xf32>
    %125 = vector.shape_cast %93 : vector<1x1xf32> to vector<1x1xf32>
    %126 = vector.broadcast %125 : vector<1x1xf32> to vector<1x128xf32>
    %127 = arith.select %113, %126, %124 : vector<1x128xi1>, vector<1x128xf32>
    %c0_25 = arith.constant 0 : index
    %c0_26 = arith.constant 0 : index
    %128 = vector.load %arg5[%c0_25, %c0_26] : memref<1x128xf32, #tpu.memory_space<vmem>>, vector<1x128xf32>
    tpu.vector_store %arg5[%c0_25, %c0_26], %127 {strides = array<i32>} : memref<1x128xf32, #tpu.memory_space<vmem>>, vector<1x128xf32>,
    return
  }
}

</mosaic_0001>

<llo_original>
// kernel: tpu_custom_call.1
$region0: #{tpu_custom_call.1}
  #allocation0 [shape = 'u32[]', space=smem, size = 0x4, offset = 0x4, fixed_abs, tag = 'smem constant byte address 0x4 - core index']
  #allocation1 [shape = 'u32[144,128]{1,0:T(1,128)}', space=vmem, size = 0x12000, scoped, tag = 'internal scratch']
  %s0 = inlined_call_operand.hbm [shape: bf16[8,128], index: 0, kind: input, shape index: {}]
  %s1 = inlined_call_operand.hbm [shape: bf16[128,128], index: 1, kind: input, shape index: {}]
  %s2 = inlined_call_operand.vmem [shape: f32[1,128], index: 2, kind: input, shape index: {}]
  %s3 = inlined_call_operand.hbm [shape: bf16[128,128], index: 3, kind: input, shape index: {}]
  %s4 = inlined_call_operand.vmem [shape: s32[8], index: 4, kind: input, shape index: {}]
  %s5 = inlined_call_operand.hbm [shape: f32[1,128], index: 5, kind: output, shape index: {}]
  %s6 = sld [smem:[#allocation0]]
  $region46: #{tpu_custom_call.1} parent=0
    _
  %s8 = ssub.s32 1, %s6
  %s9 = scalar_select 0, %s8, %s6
  $region1: #{tpu_custom_call.1} parent=0
    #allocation2 [shape = 'u8[2048]{0}', space=vmem, size = 0x800, scoped, tag = 'input window, operand 0, single buffered']
    #allocation3 [shape = 's32[1]{0}', space=sflag, size = 0x4, scoped, tag = 'scoped memory for tpu_custom_call.1']
    #allocation4 [shape = 's32[1]{0}', space=sflag, size = 0x4, scoped, tag = 'scoped memory for tpu_custom_call.1']
    #allocation5 [shape = 's32[1]{0}', space=sflag, size = 0x4, scoped, tag = 'scoped memory for tpu_custom_call.1']
    #allocation6 [shape = 'u8[32768]{0}', space=vmem, size = 0x8000, scoped, tag = 'input window, operand 1, single buffered']
    #allocation7 [shape = 's32[1]{0}', space=sflag, size = 0x4, scoped, tag = 'scoped memory for tpu_custom_call.1']
    #allocation8 [shape = 'u8[32768]{0}', space=vmem, size = 0x8000, scoped, tag = 'input window, operand 3, single buffered']
    #allocation9 [shape = 'u8[512]{0}', space=smem, size = 0x200, scoped, tag = 'input window, operand 4, single buffered']
    #allocation10 [shape = 'u8[512]{0}', space=vmem, size = 0x400, scoped, tag = 'output window, operand 0, single buffered']
    %10 = vsyncpa [#allocation3], 0
    %11 = vsyncpa [#allocation7], 0
    %12 = vsyncpa [#allocation5], 0
    %13 = vsyncpa [#allocation4], 0
    // Predicated region
    $region2: #{tpu_custom_call.1} parent=1 // pred_check
      _
    $region3: #{tpu_custom_call.1} parent=1 // pred_check_branch
      %15 = sbr.rel (0) target = $region5
    $region4: #{tpu_custom_call.1} parent=1 // pred_region
      %s17 = ssub.s32 64, 64
      %18 = vsyncadd [#allocation3], %s17
      %s20 = sshll.u32 [#allocation2], 4
      %s21 = int_to_ptr.vmem [resolvable:$true] %s20
      %23 = dma.hbm_to_vmem [thread:$0]  %s0, 64, %s21, [#allocation3]
    $region5: #{tpu_custom_call.1} parent=1 // pred_fallthru
      _
    // Predicated region
    $region6: #{tpu_custom_call.1} parent=1 // pred_check
      _
    $region7: #{tpu_custom_call.1} parent=1 // pred_check_branch
      %25 = sbr.rel (0) target = $region9
    $region8: #{tpu_custom_call.1} parent=1 // pred_region
      %s27 = ssub.s32 1024, 1024
      %28 = vsyncadd [#allocation7], %s27
      %s29 = sshll.u32 [#allocation6], 4
      %s30 = int_to_ptr.vmem [resolvable:$true] %s29
      %35 = dma.hbm_to_vmem [thread:$0]  %s1, 1024, %s30, [#allocation7], 64, 64, 4
    $region9: #{tpu_custom_call.1} parent=1 // pred_fallthru
      _
    // Predicated region
    $region10: #{tpu_custom_call.1} parent=1 // pred_check
      _
    $region11: #{tpu_custom_call.1} parent=1 // pred_check_branch
      %37 = sbr.rel (0) target = $region13
    $region12: #{tpu_custom_call.1} parent=1 // pred_region
      _
    $region13: #{tpu_custom_call.1} parent=1 // pred_fallthru
      _
    // Predicated region
    $region14: #{tpu_custom_call.1} parent=1 // pred_check
      _
    $region15: #{tpu_custom_call.1} parent=1 // pred_check_branch
      %39 = sbr.rel (0) target = $region17
    $region16: #{tpu_custom_call.1} parent=1 // pred_region
      %s41 = ssub.s32 1024, 1024
      %42 = vsyncadd [#allocation7], %s41
      %s43 = sshll.u32 [#allocation8], 4
      %s44 = int_to_ptr.vmem [resolvable:$true] %s43
      %49 = dma.hbm_to_vmem [thread:$0]  %s3, 1024, %s44, [#allocation7], 64, 64, 4
    $region17: #{tpu_custom_call.1} parent=1 // pred_fallthru
      _
    // Predicated region
    $region18: #{tpu_custom_call.1} parent=1 // pred_check
      _
    $region19: #{tpu_custom_call.1} parent=1 // pred_check_branch
      %51 = sbr.rel (0) target = $region21
    $region20: #{tpu_custom_call.1} parent=1 // pred_region
      %s53 = ssub.s32 16, 16
      %54 = vsyncadd [#allocation5], %s53
      %s56 = sshll.u32 %s4, 4
      %s57 = int_to_ptr.vmem [resolvable:$true] %s56
      %59 = dma.vmem_to_smem %s57, 16, [#allocation9], [#allocation5]
    $region21: #{tpu_custom_call.1} parent=1 // pred_fallthru
      _
    // Predicated region
    $region22: #{tpu_custom_call.1} parent=1 // pred_check
      _
    $region23: #{tpu_custom_call.1} parent=1 // pred_check_branch
      %61 = sbr.rel (0) target = $region25
    $region24: #{tpu_custom_call.1} parent=1 // pred_region
      %62 = dma.done [#allocation3], 64
    $region25: #{tpu_custom_call.1} parent=1 // pred_fallthru
      _
    // Predicated region
    $region26: #{tpu_custom_call.1} parent=1 // pred_check
      _
    $region27: #{tpu_custom_call.1} parent=1 // pred_check_branch
      %64 = sbr.rel (0) target = $region29
    $region28: #{tpu_custom_call.1} parent=1 // pred_region
      %65 = dma.done [#allocation7], 1024
    $region29: #{tpu_custom_call.1} parent=1 // pred_fallthru
      _
    // Predicated region
    $region30: #{tpu_custom_call.1} parent=1 // pred_check
      _
    $region31: #{tpu_custom_call.1} parent=1 // pred_check_branch
      %67 = sbr.rel (0) target = $region33
    $region32: #{tpu_custom_call.1} parent=1 // pred_region
      %68 = dma.done [#allocation7], 1024
    $region33: #{tpu_custom_call.1} parent=1 // pred_fallthru
      _
    // Predicated region
    $region34: #{tpu_custom_call.1} parent=1 // pred_check
      _
    $region35: #{tpu_custom_call.1} parent=1 // pred_check_branch
      %70 = sbr.rel (0) target = $region37
    $region36: #{tpu_custom_call.1} parent=1 // pred_region
      %71 = dma.done [#allocation5], 16
    $region37: #{tpu_custom_call.1} parent=1 // pred_fallthru
      _
    %72 = sfence
    %v74 = vld [vmem:[#allocation2] sm:$0xf]
    %v75 = vld [vmem:[#allocation6] sm:$0xf]
    %v76 = vld [vmem:[#allocation6 + $0x4] sm:$0xf]
    %v77 = vld [vmem:[#allocation6 + $0x8] sm:$0xf]
    %v78 = vld [vmem:[#allocation6 + $0xc] sm:$0xf]
    %v79 = vld [vmem:[#allocation6 + $0x10] sm:$0xf]
    %v80 = vld [vmem:[#allocation6 + $0x14] sm:$0xf]
    %v81 = vld [vmem:[#allocation6 + $0x18] sm:$0xf]
    %v82 = vld [vmem:[#allocation6 + $0x1c] sm:$0xf]
    %v83 = vld [vmem:[#allocation6 + $0x20] sm:$0xf]
    %v84 = vld [vmem:[#allocation6 + $0x24] sm:$0xf]
    %v85 = vld [vmem:[#allocation6 + $0x28] sm:$0xf]
    %v86 = vld [vmem:[#allocation6 + $0x2c] sm:$0xf]
    %v87 = vld [vmem:[#allocation6 + $0x30] sm:$0xf]
    %v88 = vld [vmem:[#allocation6 + $0x34] sm:$0xf]
    %v89 = vld [vmem:[#allocation6 + $0x38] sm:$0xf]
    %v90 = vld [vmem:[#allocation6 + $0x3c] sm:$0xf]
    %v91 = vld [vmem:[%s2] sm:$0x1]
    %v93 = vlaneseq
    %v94 = vshrl.u32 %v93, 7
    %v95 = vsub.s32 0, %v94
    %v96 = vrot.slane %v91, %v95
    %v114 = vunpack.c.l.b16 %v75
    %v115 = vunpack.c.l.b16 %v76
    %v116 = vunpack.c.l.b16 %v77
    %v117 = vunpack.c.l.b16 %v78
    %v118 = vunpack.c.l.b16 %v79
    %v119 = vunpack.c.l.b16 %v80
    %v120 = vunpack.c.l.b16 %v81
    %v121 = vunpack.c.l.b16 %v82
    %v122 = vunpack.c.l.b16 %v83
    %v123 = vunpack.c.l.b16 %v84
    %v124 = vunpack.c.l.b16 %v85
    %v125 = vunpack.c.l.b16 %v86
    %v126 = vunpack.c.l.b16 %v87
    %v127 = vunpack.c.l.b16 %v88
    %v128 = vunpack.c.l.b16 %v89
    %v129 = vunpack.c.l.b16 %v90
    %v130 = vpack.c.b16 %v115, %v114
    %v131 = vpack.c.b16 %v117, %v116
    %v132 = vpack.c.b16 %v119, %v118
    %v133 = vpack.c.b16 %v121, %v120
    %v134 = vpack.c.b16 %v123, %v122
    %v135 = vpack.c.b16 %v125, %v124
    %v136 = vpack.c.b16 %v127, %v126
    %v137 = vpack.c.b16 %v129, %v128
    %146 = vmatprep.subr.bf16.mxu0 0
    %147 = vmatpush1.bf16.msra.mxu0 %v130
    %148 = vmatprep.subr.bf16.mxu0 0
    %149 = vmatpush1.bf16.msra.mxu0 %v131
    %150 = vmatprep.subr.bf16.mxu0 0
    %151 = vmatpush1.bf16.msra.mxu0 %v132
    %152 = vmatprep.subr.bf16.mxu0 0
    %153 = vmatpush1.bf16.msra.mxu0 %v133
    %154 = vmatprep.subr.bf16.mxu0 0
    %155 = vmatpush1.bf16.msra.mxu0 %v134
    %156 = vmatprep.subr.bf16.mxu0 0
    %157 = vmatpush1.bf16.msra.mxu0 %v135
    %158 = vmatprep.subr.bf16.mxu0 0
    %159 = vmatpush1.bf16.msra.mxu0 %v136
    %160 = vmatprep.subr.bf16.mxu0 0
    %161 = vmatpush1.bf16.msra.mxu0 %v137
    %162 = vmatprep.subr.bf16.mxu0 0
    %163 = vmatpush1.bf16.msra.mxu0 0
    %164 = vmatprep.subr.bf16.mxu0 0
    %165 = vmatpush1.bf16.msra.mxu0 0
    %166 = vmatprep.subr.bf16.mxu0 0
    %167 = vmatpush1.bf16.msra.mxu0 0
    %168 = vmatprep.subr.bf16.mxu0 0
    %169 = vmatpush1.bf16.msra.mxu0 0
    %170 = vmatprep.subr.bf16.mxu0 0
    %171 = vmatpush1.bf16.msra.mxu0 0
    %172 = vmatprep.subr.bf16.mxu0 0
    %173 = vmatpush1.bf16.msra.mxu0 0
    %174 = vmatprep.subr.bf16.mxu0 0
    %175 = vmatpush1.bf16.msra.mxu0 0
    %176 = vmatprep.subr.bf16.mxu0 0
    %177 = vmatpush1.bf16.msra.mxu0 0
    %178 = vmatprep.mubr.bf16.mxu0 0
    %179 = vmatmul.mubr.bf16.gmra.mrb[0].mxu0 %v74
    %v180 = vpop.f32.mrb[0].mxu0
    %v181 = vadd.f32 %v96, %v180
    %v182 = vpop.f32.mrb[0].mxu0
    %v183 = vpop.f32.mrb[0].mxu0
    %v184 = vpop.f32.mrb[0].mxu0
    %185 = vdwg.mxu0
    %v186 = vtanh.pop %v181
    %v187 = vpack.c.bf16 %v186, %v186
    %v188 = vld [vmem:[#allocation8] sm:$0xf]
    %v189 = vld [vmem:[#allocation8 + $0x4] sm:$0xf]
    %v190 = vld [vmem:[#allocation8 + $0x8] sm:$0xf]
    %v191 = vld [vmem:[#allocation8 + $0xc] sm:$0xf]
    %v192 = vld [vmem:[#allocation8 + $0x10] sm:$0xf]
    %v193 = vld [vmem:[#allocation8 + $0x14] sm:$0xf]
    %v194 = vld [vmem:[#allocation8 + $0x18] sm:$0xf]
    %v195 = vld [vmem:[#allocation8 + $0x1c] sm:$0xf]
    %v196 = vld [vmem:[#allocation8 + $0x20] sm:$0xf]
    %v197 = vld [vmem:[#allocation8 + $0x24] sm:$0xf]
    %v198 = vld [vmem:[#allocation8 + $0x28] sm:$0xf]
    %v199 = vld [vmem:[#allocation8 + $0x2c] sm:$0xf]
    %v200 = vld [vmem:[#allocation8 + $0x30] sm:$0xf]
    %v201 = vld [vmem:[#allocation8 + $0x34] sm:$0xf]
    %v202 = vld [vmem:[#allocation8 + $0x38] sm:$0xf]
    %v203 = vld [vmem:[#allocation8 + $0x3c] sm:$0xf]
    %v220 = vunpack.c.l.b16 %v188
    %v221 = vunpack.c.l.b16 %v189
    %v222 = vunpack.c.l.b16 %v190
    %v223 = vunpack.c.l.b16 %v191
    %v224 = vunpack.c.l.b16 %v192
    %v225 = vunpack.c.l.b16 %v193
    %v226 = vunpack.c.l.b16 %v194
    %v227 = vunpack.c.l.b16 %v195
    %v228 = vunpack.c.l.b16 %v196
    %v229 = vunpack.c.l.b16 %v197
    %v230 = vunpack.c.l.b16 %v198
    %v231 = vunpack.c.l.b16 %v199
    %v232 = vunpack.c.l.b16 %v200
    %v233 = vunpack.c.l.b16 %v201
    %v234 = vunpack.c.l.b16 %v202
    %v235 = vunpack.c.l.b16 %v203
    %v236 = vpack.c.b16 %v221, %v220
    %v237 = vpack.c.b16 %v223, %v222
    %v238 = vpack.c.b16 %v225, %v224
    %v239 = vpack.c.b16 %v227, %v226
    %v240 = vpack.c.b16 %v229, %v228
    %v241 = vpack.c.b16 %v231, %v230
    %v242 = vpack.c.b16 %v233, %v232
    %v243 = vpack.c.b16 %v235, %v234
    %252 = vmatprep.subr.bf16.mxu0 0
    %253 = vmatpush1.bf16.msra.mxu0 %v236
    %254 = vmatprep.subr.bf16.mxu0 0
    %255 = vmatpush1.bf16.msra.mxu0 %v237
    %256 = vmatprep.subr.bf16.mxu0 0
    %257 = vmatpush1.bf16.msra.mxu0 %v238
    %258 = vmatprep.subr.bf16.mxu0 0
    %259 = vmatpush1.bf16.msra.mxu0 %v239
    %260 = vmatprep.subr.bf16.mxu0 0
    %261 = vmatpush1.bf16.msra.mxu0 %v240
    %262 = vmatprep.subr.bf16.mxu0 0
    %263 = vmatpush1.bf16.msra.mxu0 %v241
    %264 = vmatprep.subr.bf16.mxu0 0
    %265 = vmatpush1.bf16.msra.mxu0 %v242
    %266 = vmatprep.subr.bf16.mxu0 0
    %267 = vmatpush1.bf16.msra.mxu0 %v243
    %268 = vmatprep.subr.bf16.mxu0 0
    %269 = vmatpush1.bf16.msra.mxu0 0
    %270 = vmatprep.subr.bf16.mxu0 0
    %271 = vmatpush1.bf16.msra.mxu0 0
    %272 = vmatprep.subr.bf16.mxu0 0
    %273 = vmatpush1.bf16.msra.mxu0 0
    %274 = vmatprep.subr.bf16.mxu0 0
    %275 = vmatpush1.bf16.msra.mxu0 0
    %276 = vmatprep.subr.bf16.mxu0 0
    %277 = vmatpush1.bf16.msra.mxu0 0
    %278 = vmatprep.subr.bf16.mxu0 0
    %279 = vmatpush1.bf16.msra.mxu0 0
    %280 = vmatprep.subr.bf16.mxu0 0
    %281 = vmatpush1.bf16.msra.mxu0 0
    %282 = vmatprep.subr.bf16.mxu0 0
    %283 = vmatpush1.bf16.msra.mxu0 0
    %284 = vmatprep.mubr.bf16.mxu0 0
    %285 = vmatmul.mubr.bf16.gmra.mrb[0].mxu0 %v187
    %v286 = vpop.f32.mrb[0].mxu0
    %v287 = vadd.f32 0.0, %v286
    %v288 = vpop.f32.mrb[0].mxu0
    %v289 = vpop.f32.mrb[0].mxu0
    %v290 = vpop.f32.mrb[0].mxu0
    %291 = vdwg.mxu0
    %v292 = vmul.f32 %v287, 8.838835
    %v293 = vlaneseq
    %v294 = vand.u32 %v293, 127
    %v295 = vlaneseq
    %v296 = vshrl.u32 %v295, 7
    %vm297 = vcmp.eq.s32.totalorder %v296, 0
    %s298 = sld [smem:[#allocation9]]
    %v299 = vstv %s298
    %v300 = vsel %vm297, %v299, 4294967196
    %vm301 = vcmp.eq.s32.totalorder %v296, 1
    %s302 = sld [smem:[#allocation9 + $0x1]]
    %v303 = vstv %s302
    %v304 = vsel %vm301, %v303, %v300
    %vm305 = vcmp.eq.s32.totalorder %v296, 2
    %s306 = sld [smem:[#allocation9 + $0x2]]
    %v307 = vstv %s306
    %v308 = vsel %vm305, %v307, %v304
    %vm309 = vcmp.eq.s32.totalorder %v296, 3
    %s310 = sld [smem:[#allocation9 + $0x3]]
    %v311 = vstv %s310
    %v312 = vsel %vm309, %v311, %v308
    %vm313 = vcmp.eq.s32.totalorder %v296, 4
    %s314 = sld [smem:[#allocation9 + $0x4]]
    %v315 = vstv %s314
    %v316 = vsel %vm313, %v315, %v312
    %vm317 = vcmp.eq.s32.totalorder %v296, 5
    %s318 = sld [smem:[#allocation9 + $0x5]]
    %v319 = vstv %s318
    %v320 = vsel %vm317, %v319, %v316
    %vm321 = vcmp.eq.s32.totalorder %v296, 6
    %s322 = sld [smem:[#allocation9 + $0x6]]
    %v323 = vstv %s322
    %v324 = vsel %vm321, %v323, %v320
    %vm325 = vcmp.eq.s32.totalorder %v296, 7
    %s326 = sld [smem:[#allocation9 + $0x7]]
    %v327 = vstv %s326
    %v328 = vsel %vm325, %v327, %v324
    %vm329 = vcmp.ne.s32.totalorder %v328, 4294967196
    %v330 = vsel %vm329, 1, 0
    %v331 = vcvt.s32.f32 %v330
    %vm332 = vcmp.lt.s32.totalorder %v294, 8
    %v333 = vsel %vm332, %v292, -1e+30
    %334 = vmax.xlane.f32.xlu0 %v333
    %v335 = vpop.xlane.xlu0 %334
    %v336 = vsub.f32 %v333, %v335
    %v337 = vmul.f32 %v336, 1.442695
    %v338 = vpow.pop %v337
    %339 = vadd.xlane.f32.xlu0 %v338
    %v340 = vpop.xlane.xlu0 %339
    %v341 = vlog2.pop %v340
    %v342 = vmul.f32 %v341, 0.6931472
    %v343 = vadd.f32 %v342, %v335
    %vm344 = vcmp.eq.s32.totalorder %v294, %v328
    %v345 = vsel %vm344, 1, 0
    %v346 = vcvt.s32.f32 %v345
    %v347 = vmul.f32 %v333, %v346
    %348 = vadd.xlane.f32.xlu0 %v347
    %v349 = vpop.xlane.xlu0 %348
    %v350 = vsub.f32 %v343, %v349
    %v351 = vmul.f32 %v350, %v331
    %vm352 = vcmask 7168
    %v353 = vsel %vm352, %v331, 0.0
    %354 = vadd.xlane.f32.xlu0 %v353
    %v355 = vpop.xlane.xlu0 %354
    %v356 = vrot.slane %v355, 4
    %v357 = vadd.f32 %v355, %v356
    %v358 = vrot.slane %v357, 2
    %v359 = vadd.f32 %v357, %v358
    %v360 = vrot.slane %v359, 1
    %v361 = vadd.f32 %v359, %v360
    %s362 = vtos %v361
    %v363 = vstv %s362
    %v364 = vsel %vm352, %v351, 0.0
    %365 = vadd.xlane.f32.xlu0 %v364
    %v366 = vpop.xlane.xlu0 %365
    %v367 = vrot.slane %v366, 4
    %v368 = vadd.f32 %v366, %v367
    %v369 = vrot.slane %v368, 2
    %v370 = vadd.f32 %v368, %v369
    %v371 = vrot.slane %v370, 1
    %v372 = vadd.f32 %v370, %v371
    %s373 = vtos %v372
    %v374 = vstv %s373
    %v375 = vmax.f32 %v363, 1.0
    %v376 = vrcp.pop %v375
    %v377 = vmul.f32 %v374, %v376
    %vm378 = vcmp.eq.f32.partialorder %v333, %v335
    %v379 = vsel %vm378, %v294, 128
    %v380 = vand.u32 %v379, 65535
    %v381 = vshra.s32 %v379, 16
    %v382 = vcvt.s32.f32 %v380
    %v383 = vcvt.s32.f32 %v381
    %384 = vmin.xlane.f32.xlu0 %v383
    %v385 = vpop.xlane.xlu0 %384
    %vm386 = vcmp.eq.f32.partialorder %v383, %v385
    %v387 = vsel %vm386, %v382, inf
    %388 = vmin.xlane.f32.xlu0 %v387
    %v389 = vpop.xlane.xlu0 %388
    %v390 = vcvt.f32.s32 %v389
    %v391 = vcvt.f32.s32 %v385
    %v392 = vshll.u32 %v391, 16
    %v393 = vadd.s32 %v392, %v390
    %vm394 = vcmp.eq.s32.totalorder %v393, %v328
    %vm395 = vmand %vm394, %vm329
    %v396 = vsel %vm395, 1, 0
    %v397 = vcvt.s32.f32 %v396
    %v398 = vsel %vm352, %v397, 0.0
    %399 = vadd.xlane.f32.xlu0 %v398
    %v400 = vpop.xlane.xlu0 %399
    %v401 = vrot.slane %v400, 4
    %v402 = vadd.f32 %v400, %v401
    %v403 = vrot.slane %v402, 2
    %v404 = vadd.f32 %v402, %v403
    %v405 = vrot.slane %v404, 1
    %v406 = vadd.f32 %v404, %v405
    %s407 = vtos %v406
    %vm408 = vcmp.eq.s32.totalorder %v294, 0
    %vm409 = vcmp.eq.s32.totalorder %v294, 1
    %vm410 = vcmp.eq.s32.totalorder %v294, 2
    %v411 = vsel %vm410, %v363, 0.0
    %v412 = vstv %s407
    %v413 = vsel %vm409, %v412, %v411
    %v414 = vsel %vm408, %v377, %v413
    %415 = vst [vmem:[#allocation10] sm:$0x1] %v414
    // Predicated region
    $region38: #{tpu_custom_call.1} parent=1 // pred_check
      _
    $region39: #{tpu_custom_call.1} parent=1 // pred_check_branch
      %417 = sbr.rel (0) target = $region41
    $region40: #{tpu_custom_call.1} parent=1 // pred_region
      %s419 = ssub.s32 16, 16
      %420 = vsyncadd [#allocation4], %s419
      %s422 = sshll.u32 [#allocation10], 4
      %s423 = int_to_ptr.vmem [resolvable:$true] %s422
      %425 = dma.vmem_to_hbm [thread:$0]  %s423, 16, %s5, [#allocation4]
    $region41: #{tpu_custom_call.1} parent=1 // pred_fallthru
      _
    // Predicated region
    $region42: #{tpu_custom_call.1} parent=1 // pred_check
      _
    $region43: #{tpu_custom_call.1} parent=1 // pred_check_branch
      %427 = sbr.rel (0) target = $region45
    $region44: #{tpu_custom_call.1} parent=1 // pred_region
      %428 = dma.done [#allocation4], 16
    $region45: #{tpu_custom_call.1} parent=1 // pred_fallthru
      _
    %429 = vsyncpa [#allocation3], 1
    %430 = vsyncpa [#allocation7], 1
    %431 = vsyncpa [#allocation4], 1
    %432 = vsyncpa [#allocation5], 1

</llo_original>
